<compile_context>
chip_gen: v7x
topology: tpu7x:2x2x1
jax: 0.10.0
libtpu: 0.0.40
codegen_flags: <defaults>
</compile_context>

<pallas_src>
import functools
import math

import jax
import jax.numpy as jnp
from jax.experimental import pallas as pl
from jax.experimental.pallas import tpu as pltpu


def _mlp_kernel(n_linear, x_ref, *refs):
    """refs = (w_0, ..., w_{n-1}, bias_ref, o_ref).

    x_ref:   (TB, Dp)       bf16   batch tile of the (padded) MLP input
    w_i:     (inp_i, outp_i) bf16  padded, already transposed to (in, out)
    bias_ref:(n_linear, Cmax) f32  packed per-layer biases (zero padded)
    o_ref:   (TB, Op)       f32    lane-dense output tile
    """
    w_refs = refs[:n_linear]
    bias_ref = refs[n_linear]
    o_ref = refs[n_linear + 1]

    biases = bias_ref[...]                      # (n_linear, Cmax) f32
    h = x_ref[...]                              # (TB, Dp) bf16

    for i in range(n_linear):
        # bf16 x bf16 -> f32 accumulate on the MXU.
        acc = jnp.dot(h, w_refs[i][...], preferred_element_type=jnp.float32)
        acc = acc + biases[i:i + 1, :acc.shape[1]]      # f32 bias add
        if i < n_linear - 1:
            h = jnp.maximum(acc, 0.0).astype(jnp.bfloat16)   # ReLU in f32
        else:
            o_ref[...] = acc.astype(o_ref.dtype)


def fourier_embedding_jax(t, num_bands=6):
    """t: (B,) -> (B, 2*num_bands), matching the PyTorch fourier_embedding."""
    assert t.ndim == 1, "t should be a 1D tensor of shape (batch,)"
    freqs = (2.0 ** jnp.arange(num_bands, dtype=jnp.float32)) * math.pi
    angles = t[:, None].astype(jnp.float32) * freqs[None, :]
    return jnp.concatenate([jnp.sin(angles), jnp.cos(angles)], axis=1)


def _round_up(v, m):
    return ((v + m - 1) // m) * m


def time_conditioned_mlp_forward(t, x, params, *, num_fourier_bands=6,
                                 batch_tile=None):
    """Pallas implementation of TimeConditionedMLP.forward(t, x).

    params: list of (W, b) per nn.Linear, PyTorch convention W: (out, in).
    Returns an array with the same shape as x (matching `.view(x_shape)`).
    """
    x_shape = x.shape
    B = x_shape[0]
    xf = x.reshape(B, -1).astype(jnp.float32)

    # --- wrapper glue: fourier embedding + concat (tiny, kept out of kernel) ---
    emb = fourier_embedding_jax(t, num_fourier_bands)       # (B, 2L)
    full = jnp.concatenate([xf, emb], axis=1)                # (B, D_in)
    D_in = full.shape[1]

    n_linear = len(params)
    out_dim = params[-1][0].shape[0]
    assert out_dim == math.prod(x_shape[1:]), \
        "output_dim must equal prod(x.shape[1:]) for the final view()"
    assert params[0][0].shape[1] == D_in

    # --- pad every feature dim to a multiple of 128 (lane-dense everywhere) ---
    dims_in = [_round_up(w.shape[1], 128) for (w, _) in params]
    dims_out = [_round_up(w.shape[0], 128) for (w, _) in params]
    Dp, Op = dims_in[0], dims_out[-1]
    Cmax = max(dims_out)

    TB = batch_tile or min(256, _round_up(B, 8))             # batch tile (sublane mult.)
    Bp = _round_up(B, TB)
    num_tiles = Bp // TB

    # Padded, bf16 MLP input.
    xin = jnp.zeros((Bp, Dp), jnp.float32).at[:B, :D_in].set(full)
    xin = xin.astype(jnp.bfloat16)

    # Padded, transposed, bf16 weights + packed f32 biases.
    w_padded = []
    bias_rows = []
    for i, (w, b) in enumerate(params):
        wt = w.T.astype(jnp.float32)                          # (in, out)
        wp = jnp.zeros((dims_in[i], dims_out[i]), jnp.float32)
        wp = wp.at[:wt.shape[0], :wt.shape[1]].set(wt)
        w_padded.append(wp.astype(jnp.bfloat16))
        br = jnp.zeros((Cmax,), jnp.float32).at[:b.shape[0]].set(
            b.astype(jnp.float32))
        bias_rows.append(br)
    biases = jnp.stack(bias_rows, axis=0)                     # (n_linear, Cmax)

    kernel = functools.partial(_mlp_kernel, n_linear)

    in_specs = [pl.BlockSpec((TB, Dp), lambda gi: (gi, 0))]
    for i in range(n_linear):
        in_specs.append(
            pl.BlockSpec((dims_in[i], dims_out[i]), lambda gi: (0, 0)))
    in_specs.append(pl.BlockSpec((n_linear, Cmax), lambda gi: (0, 0)))

    out = pl.pallas_call(
        kernel,
        out_shape=jax.ShapeDtypeStruct((Bp, Op), jnp.float32),
        grid_spec=pltpu.PrefetchScalarGridSpec(
            num_scalar_prefetch=0,
            grid=(num_tiles,),
            in_specs=in_specs,
            out_specs=pl.BlockSpec((TB, Op), lambda gi: (gi, 0)),
        ),
        compiler_params=pltpu.CompilerParams(
            dimension_semantics=("parallel",),        # batch tiles independent
            vmem_limit_bytes=32 * 1024 * 1024),
    )(xin, *w_padded, biases)

    return out[:B, :out_dim].reshape(x_shape)


def time_conditioned_mlp_reference(t, x, params, *, num_fourier_bands=6):
    """Plain-JAX f32 reference mirroring the PyTorch module semantics."""
    B = x.shape[0]
    xf = x.reshape(B, -1).astype(jnp.float32)
    emb = fourier_embedding_jax(t, num_fourier_bands)
    h = jnp.concatenate([xf, emb], axis=1)
    n = len(params)
    for i, (w, b) in enumerate(params):
        h = h @ w.T.astype(jnp.float32) + b.astype(jnp.float32)
        if i < n - 1:
            h = jnp.maximum(h, 0.0)
    return h.reshape(x.shape)


if __name__ == "__main__":
    # Shapes implied by the module defaults: hidden_dim=128, n_layers=3,
    # num_fourier_bands=6; small batch / feature dims for the demo.
    B, x_dim, hidden_dim, n_layers, L = 2, 4, 128, 3, 6
    output_dim = x_dim                      # required for the final .view(x_shape)
    input_dim = x_dim + 2 * L

    key = jax.random.PRNGKey(0)
    layer_dims = ([(input_dim, hidden_dim)]
                  + [(hidden_dim, hidden_dim)] * (n_layers - 1)
                  + [(hidden_dim, output_dim)])

    params = []
    for (fan_in, fan_out) in layer_dims:
        key, kw, kb = jax.random.split(key, 3)
        bound = 1.0 / math.sqrt(fan_in)     # PyTorch nn.Linear default init range
        w = jax.random.uniform(kw, (fan_out, fan_in), jnp.float32,
                               minval=-bound, maxval=bound)
        b = jax.random.uniform(kb, (fan_out,), jnp.float32,
                               minval=-bound, maxval=bound)
        params.append((w, b))

    key, kx, kt = jax.random.split(key, 3)
    x = jax.random.normal(kx, (B, x_dim), jnp.float32)
    t = jax.random.uniform(kt, (B,), jnp.float32)   # 1D, as fourier_embedding requires

    out = jax.block_until_ready(
        time_conditioned_mlp_forward(t, x, params, num_fourier_bands=L))
    ref = time_conditioned_mlp_reference(t, x, params, num_fourier_bands=L)

    assert out.shape == x.shape, out.shape
    assert bool(jnp.all(jnp.isfinite(out)))
    max_err = float(jnp.max(jnp.abs(out - ref)))
    assert max_err < 5e-2, f"mismatch vs reference: max_err={max_err}"

    print("KERNEL_OK")
</pallas_src>

<mosaic_0001>
module attributes {stable_mosaic.version = 11 : i64} {
  func.func @_mlp_kernel(%arg0: i32, %arg1: memref<8x128xbf16, #tpu.memory_space<vmem>>, %arg2: memref<128x128xbf16, #tpu.memory_space<vmem>>, %arg3: memref<128x128xbf16, #tpu.memory_space<vmem>>, %arg4: memref<128x128xbf16, #tpu.memory_space<vmem>>, %arg5: memref<128x128xbf16, #tpu.memory_space<vmem>>, %arg6: memref<4x128xf32, #tpu.memory_space<vmem>>, %arg7: memref<8x128xf32, #tpu.memory_space<vmem>>) attributes {dimension_semantics = [#tpu.dimension_semantics<parallel>], iteration_bounds = array<i64: 1>, scalar_prefetch = 0 : i64, scratch_operands = 0 : i64, tpu.core_type = #tpu.core_type<tc>, window_params = [{transform_indices = @transform_0, window_bounds = array<i64: 8, 128>}, {pipeline_mode = #tpu.pipeline_mode<synchronous>, transform_indices = @transform_1, window_bounds = array<i64: 128, 128>}, {pipeline_mode = #tpu.pipeline_mode<synchronous>, transform_indices = @transform_2, window_bounds = array<i64: 128, 128>}, {pipeline_mode = #tpu.pipeline_mode<synchronous>, transform_indices = @transform_3, window_bounds = array<i64: 128, 128>}, {pipeline_mode = #tpu.pipeline_mode<synchronous>, transform_indices = @transform_4, window_bounds = array<i64: 128, 128>}, {pipeline_mode = #tpu.pipeline_mode<synchronous>, transform_indices = @transform_5, window_bounds = array<i64: 4, 128>}, {transform_indices = @transform_6, window_bounds = array<i64: 8, 128>}]} {
    %c0 = arith.constant 0 : index
    %c0_0 = arith.constant 0 : index
    %0 = vector.load %arg6[%c0, %c0_0] : memref<4x128xf32, #tpu.memory_space<vmem>>, vector<4x128xf32>
    %c0_1 = arith.constant 0 : index
    %c0_2 = arith.constant 0 : index
    %1 = vector.load %arg1[%c0_1, %c0_2] : memref<8x128xbf16, #tpu.memory_space<vmem>>, vector<8x128xbf16>
    %c0_3 = arith.constant 0 : index
    %c0_4 = arith.constant 0 : index
    %2 = vector.load %arg2[%c0_3, %c0_4] : memref<128x128xbf16, #tpu.memory_space<vmem>>, vector<128x128xbf16>
    %cst = arith.constant dense<0.000000e+00> : vector<8x128xf32>
    %3 = tpu.matmul %1, %2, %cst {dimension_numbers = #tpu.dot_dimension_numbers<[1], [0], [0], [1], [0, 0, 1, 1], [], []>} : vector<8x128xbf16>, vector<128x128xbf16>, vector<8x128xf32> -> vector<8x128xf32>
    %4 = vector.extract_strided_slice %0 {offsets = [0, 0], sizes = [1, 128], strides = [1, 1]} : vector<4x128xf32> to vector<1x128xf32>
    %5 = vector.broadcast %4 : vector<1x128xf32> to vector<8x128xf32>
    %6 = arith.addf %3, %5 : vector<8x128xf32>
    %cst_5 = arith.constant 0.000000e+00 : f32
    %7 = vector.broadcast %cst_5 : f32 to vector<8x128xf32>
    %8 = arith.maximumf %6, %7 : vector<8x128xf32>
    %9 = arith.truncf %8 : vector<8x128xf32> to vector<8x128xbf16>
    %c0_6 = arith.constant 0 : index
    %c0_7 = arith.constant 0 : index
    %10 = vector.load %arg3[%c0_6, %c0_7] : memref<128x128xbf16, #tpu.memory_space<vmem>>, vector<128x128xbf16>
    %cst_8 = arith.constant dense<0.000000e+00> : vector<8x128xf32>
    %11 = tpu.matmul %9, %10, %cst_8 {dimension_numbers = #tpu.dot_dimension_numbers<[1], [0], [0], [1], [0, 0, 1, 1], [], []>} : vector<8x128xbf16>, vector<128x128xbf16>, vector<8x128xf32> -> vector<8x128xf32>
    %12 = vector.extract_strided_slice %0 {offsets = [1, 0], sizes = [1, 128], strides = [1, 1]} : vector<4x128xf32> to vector<1x128xf32>
    %13 = vector.broadcast %12 : vector<1x128xf32> to vector<8x128xf32>
    %14 = arith.addf %11, %13 : vector<8x128xf32>
    %cst_9 = arith.constant 0.000000e+00 : f32
    %15 = vector.broadcast %cst_9 : f32 to vector<8x128xf32>
    %16 = arith.maximumf %14, %15 : vector<8x128xf32>
    %17 = arith.truncf %16 : vector<8x128xf32> to vector<8x128xbf16>
    %c0_10 = arith.constant 0 : index
    %c0_11 = arith.constant 0 : index
    %18 = vector.load %arg4[%c0_10, %c0_11] : memref<128x128xbf16, #tpu.memory_space<vmem>>, vector<128x128xbf16>
    %cst_12 = arith.constant dense<0.000000e+00> : vector<8x128xf32>
    %19 = tpu.matmul %17, %18, %cst_12 {dimension_numbers = #tpu.dot_dimension_numbers<[1], [0], [0], [1], [0, 0, 1, 1], [], []>} : vector<8x128xbf16>, vector<128x128xbf16>, vector<8x128xf32> -> vector<8x128xf32>
    %20 = vector.extract_strided_slice %0 {offsets = [2, 0], sizes = [1, 128], strides = [1, 1]} : vector<4x128xf32> to vector<1x128xf32>
    %21 = vector.broadcast %20 : vector<1x128xf32> to vector<8x128xf32>
    %22 = arith.addf %19, %21 : vector<8x128xf32>
    %cst_13 = arith.constant 0.000000e+00 : f32
    %23 = vector.broadcast %cst_13 : f32 to vector<8x128xf32>
    %24 = arith.maximumf %22, %23 : vector<8x128xf32>
    %25 = arith.truncf %24 : vector<8x128xf32> to vector<8x128xbf16>
    %c0_14 = arith.constant 0 : index
    %c0_15 = arith.constant 0 : index
    %26 = vector.load %arg5[%c0_14, %c0_15] : memref<128x128xbf16, #tpu.memory_space<vmem>>, vector<128x128xbf16>
    %cst_16 = arith.constant dense<0.000000e+00> : vector<8x128xf32>
    %27 = tpu.matmul %25, %26, %cst_16 {dimension_numbers = #tpu.dot_dimension_numbers<[1], [0], [0], [1], [0, 0, 1, 1], [], []>} : vector<8x128xbf16>, vector<128x128xbf16>, vector<8x128xf32> -> vector<8x128xf32>
    %28 = vector.extract_strided_slice %0 {offsets = [3, 0], sizes = [1, 128], strides = [1, 1]} : vector<4x128xf32> to vector<1x128xf32>
    %29 = vector.broadcast %28 : vector<1x128xf32> to vector<8x128xf32>
    %30 = arith.addf %27, %29 : vector<8x128xf32>
    %c0_17 = arith.constant 0 : index
    %c0_18 = arith.constant 0 : index
    %31 = vector.load %arg7[%c0_17, %c0_18] : memref<8x128xf32, #tpu.memory_space<vmem>>, vector<8x128xf32>
    tpu.vector_store %arg7[%c0_17, %c0_18], %30 {strides = array<i32>} : memref<8x128xf32, #tpu.memory_space<vmem>>, vector<8x128xf32>,
    return
  }
  func.func @transform_0(%arg0: i32) -> (i32, i32) {
    %c0_i32 = arith.constant 0 : i32
    %c0_i32_0 = arith.constant 0 : i32
    return %arg0, %c0_i32 : i32, i32
  }
  func.func @transform_1(%arg0: i32) -> (i32, i32) {
    %c0_i32 = arith.constant 0 : i32
    %c0_i32_0 = arith.constant 0 : i32
    %c0_i32_1 = arith.constant 0 : i32
    return %c0_i32, %c0_i32_0 : i32, i32
  }
  func.func @transform_2(%arg0: i32) -> (i32, i32) {
    %c0_i32 = arith.constant 0 : i32
    %c0_i32_0 = arith.constant 0 : i32
    %c0_i32_1 = arith.constant 0 : i32
    return %c0_i32, %c0_i32_0 : i32, i32
  }
  func.func @transform_3(%arg0: i32) -> (i32, i32) {
    %c0_i32 = arith.constant 0 : i32
    %c0_i32_0 = arith.constant 0 : i32
    %c0_i32_1 = arith.constant 0 : i32
    return %c0_i32, %c0_i32_0 : i32, i32
  }
  func.func @transform_4(%arg0: i32) -> (i32, i32) {
    %c0_i32 = arith.constant 0 : i32
    %c0_i32_0 = arith.constant 0 : i32
    %c0_i32_1 = arith.constant 0 : i32
    return %c0_i32, %c0_i32_0 : i32, i32
  }
  func.func @transform_5(%arg0: i32) -> (i32, i32) {
    %c0_i32 = arith.constant 0 : i32
    %c0_i32_0 = arith.constant 0 : i32
    %c0_i32_1 = arith.constant 0 : i32
    return %c0_i32, %c0_i32_0 : i32, i32
  }
  func.func @transform_6(%arg0: i32) -> (i32, i32) {
    %c0_i32 = arith.constant 0 : i32
    %c0_i32_0 = arith.constant 0 : i32
    return %arg0, %c0_i32 : i32, i32
  }
}

</mosaic_0001>

<llo_original>
// kernel: tpu_custom_call.1
$region0: #{tpu_custom_call.1}
  #allocation0 [shape = 'u32[]', space=smem, size = 0x4, offset = 0x4, fixed_abs, tag = 'smem constant byte address 0x4 - core index']
  #allocation1 [shape = 'u32[144,128]{1,0:T(1,128)}', space=vmem, size = 0x12000, scoped, tag = 'internal scratch']
  %s0 = inlined_call_operand.hbm [shape: bf16[8,128], index: 0, kind: input, shape index: {}]
  %s1 = inlined_call_operand.hbm [shape: bf16[128,128], index: 1, kind: input, shape index: {}]
  %s2 = inlined_call_operand.hbm [shape: bf16[128,128], index: 2, kind: input, shape index: {}]
  %s3 = inlined_call_operand.hbm [shape: bf16[128,128], index: 3, kind: input, shape index: {}]
  %s4 = inlined_call_operand.hbm [shape: bf16[128,128], index: 4, kind: input, shape index: {}]
  %s5 = inlined_call_operand.vmem [shape: f32[4,128], index: 5, kind: input, shape index: {}]
  %s6 = inlined_call_operand.hbm [shape: f32[8,128], index: 6, kind: output, shape index: {}]
  %s7 = sld [smem:[#allocation0]]
  $region54: #{tpu_custom_call.1} parent=0
    _
  %s9 = ssub.s32 1, %s7
  %s10 = scalar_select 0, %s9, %s7
  $region1: #{tpu_custom_call.1} parent=0
    #allocation2 [shape = 'u8[2048]{0}', space=vmem, size = 0x800, scoped, tag = 'input window, operand 0, single buffered']
    #allocation3 [shape = 's32[1]{0}', space=sflag, size = 0x4, scoped, tag = 'scoped memory for tpu_custom_call.1']
    #allocation4 [shape = 's32[1]{0}', space=sflag, size = 0x4, scoped, tag = 'scoped memory for tpu_custom_call.1']
    #allocation5 [shape = 'u8[32768]{0}', space=vmem, size = 0x8000, scoped, tag = 'input window, operand 1, single buffered']
    #allocation6 [shape = 's32[1]{0}', space=sflag, size = 0x4, scoped, tag = 'scoped memory for tpu_custom_call.1']
    #allocation7 [shape = 'u8[32768]{0}', space=vmem, size = 0x8000, scoped, tag = 'input window, operand 2, single buffered']
    #allocation8 [shape = 'u8[32768]{0}', space=vmem, size = 0x8000, scoped, tag = 'input window, operand 3, single buffered']
    #allocation9 [shape = 's32[1]{0}', space=sflag, size = 0x4, scoped, tag = 'scoped memory for tpu_custom_call.1']
    #allocation10 [shape = 'u8[32768]{0}', space=vmem, size = 0x8000, scoped, tag = 'input window, operand 4, single buffered']
    #allocation11 [shape = 'u8[4096]{0}', space=vmem, size = 0x1000, scoped, tag = 'output window, operand 0, single buffered']
    %11 = vsyncpa [#allocation3], 0
    %12 = vsyncpa [#allocation6], 0
    %13 = vsyncpa [#allocation9], 0
    %14 = vsyncpa [#allocation4], 0
    // Predicated region
    $region2: #{tpu_custom_call.1} parent=1 // pred_check
      _
    $region3: #{tpu_custom_call.1} parent=1 // pred_check_branch
      %16 = sbr.rel (0) target = $region5
    $region4: #{tpu_custom_call.1} parent=1 // pred_region
      %s18 = ssub.s32 64, 64
      %19 = vsyncadd [#allocation3], %s18
      %s21 = sshll.u32 [#allocation2], 4
      %s22 = int_to_ptr.vmem [resolvable:$true] %s21
      %24 = dma.hbm_to_vmem [thread:$0]  %s0, 64, %s22, [#allocation3]
    $region5: #{tpu_custom_call.1} parent=1 // pred_fallthru
      _
    // Predicated region
    $region6: #{tpu_custom_call.1} parent=1 // pred_check
      _
    $region7: #{tpu_custom_call.1} parent=1 // pred_check_branch
      %26 = sbr.rel (0) target = $region9
    $region8: #{tpu_custom_call.1} parent=1 // pred_region
      %s28 = ssub.s32 1024, 1024
      %29 = vsyncadd [#allocation6], %s28
      %s30 = sshll.u32 [#allocation5], 4
      %s31 = int_to_ptr.vmem [resolvable:$true] %s30
      %36 = dma.hbm_to_vmem [thread:$0]  %s1, 1024, %s31, [#allocation6], 64, 64, 4
    $region9: #{tpu_custom_call.1} parent=1 // pred_fallthru
      _
    // Predicated region
    $region10: #{tpu_custom_call.1} parent=1 // pred_check
      _
    $region11: #{tpu_custom_call.1} parent=1 // pred_check_branch
      %38 = sbr.rel (0) target = $region13
    $region12: #{tpu_custom_call.1} parent=1 // pred_region
      %s40 = ssub.s32 1024, 1024
      %41 = vsyncadd [#allocation6], %s40
      %s42 = sshll.u32 [#allocation7], 4
      %s43 = int_to_ptr.vmem [resolvable:$true] %s42
      %48 = dma.hbm_to_vmem [thread:$0]  %s2, 1024, %s43, [#allocation6], 64, 64, 4
    $region13: #{tpu_custom_call.1} parent=1 // pred_fallthru
      _
    // Predicated region
    $region14: #{tpu_custom_call.1} parent=1 // pred_check
      _
    $region15: #{tpu_custom_call.1} parent=1 // pred_check_branch
      %50 = sbr.rel (0) target = $region17
    $region16: #{tpu_custom_call.1} parent=1 // pred_region
      %s52 = ssub.s32 1024, 1024
      %53 = vsyncadd [#allocation9], %s52
      %s54 = sshll.u32 [#allocation8], 4
      %s55 = int_to_ptr.vmem [resolvable:$true] %s54
      %60 = dma.hbm_to_vmem [thread:$0]  %s3, 1024, %s55, [#allocation9], 64, 64, 4
    $region17: #{tpu_custom_call.1} parent=1 // pred_fallthru
      _
    // Predicated region
    $region18: #{tpu_custom_call.1} parent=1 // pred_check
      _
    $region19: #{tpu_custom_call.1} parent=1 // pred_check_branch
      %62 = sbr.rel (0) target = $region21
    $region20: #{tpu_custom_call.1} parent=1 // pred_region
      %s64 = ssub.s32 1024, 1024
      %65 = vsyncadd [#allocation9], %s64
      %s66 = sshll.u32 [#allocation10], 4
      %s67 = int_to_ptr.vmem [resolvable:$true] %s66
      %72 = dma.hbm_to_vmem [thread:$0]  %s4, 1024, %s67, [#allocation9], 64, 64, 4
    $region21: #{tpu_custom_call.1} parent=1 // pred_fallthru
      _
    // Predicated region
    $region22: #{tpu_custom_call.1} parent=1 // pred_check
      _
    $region23: #{tpu_custom_call.1} parent=1 // pred_check_branch
      %74 = sbr.rel (0) target = $region25
    $region24: #{tpu_custom_call.1} parent=1 // pred_region
      _
    $region25: #{tpu_custom_call.1} parent=1 // pred_fallthru
      _
    // Predicated region
    $region26: #{tpu_custom_call.1} parent=1 // pred_check
      _
    $region27: #{tpu_custom_call.1} parent=1 // pred_check_branch
      %76 = sbr.rel (0) target = $region29
    $region28: #{tpu_custom_call.1} parent=1 // pred_region
      %77 = dma.done [#allocation3], 64
    $region29: #{tpu_custom_call.1} parent=1 // pred_fallthru
      _
    // Predicated region
    $region30: #{tpu_custom_call.1} parent=1 // pred_check
      _
    $region31: #{tpu_custom_call.1} parent=1 // pred_check_branch
      %79 = sbr.rel (0) target = $region33
    $region32: #{tpu_custom_call.1} parent=1 // pred_region
      %80 = dma.done [#allocation6], 1024
    $region33: #{tpu_custom_call.1} parent=1 // pred_fallthru
      _
    // Predicated region
    $region34: #{tpu_custom_call.1} parent=1 // pred_check
      _
    $region35: #{tpu_custom_call.1} parent=1 // pred_check_branch
      %82 = sbr.rel (0) target = $region37
    $region36: #{tpu_custom_call.1} parent=1 // pred_region
      %83 = dma.done [#allocation6], 1024
    $region37: #{tpu_custom_call.1} parent=1 // pred_fallthru
      _
    // Predicated region
    $region38: #{tpu_custom_call.1} parent=1 // pred_check
      _
    $region39: #{tpu_custom_call.1} parent=1 // pred_check_branch
      %85 = sbr.rel (0) target = $region41
    $region40: #{tpu_custom_call.1} parent=1 // pred_region
      %86 = dma.done [#allocation9], 1024
    $region41: #{tpu_custom_call.1} parent=1 // pred_fallthru
      _
    // Predicated region
    $region42: #{tpu_custom_call.1} parent=1 // pred_check
      _
    $region43: #{tpu_custom_call.1} parent=1 // pred_check_branch
      %88 = sbr.rel (0) target = $region45
    $region44: #{tpu_custom_call.1} parent=1 // pred_region
      %89 = dma.done [#allocation9], 1024
    $region45: #{tpu_custom_call.1} parent=1 // pred_fallthru
      _
    %v91 = vld [vmem:[%s5] sm:$0xf]
    %v92 = vld [vmem:[#allocation2] sm:$0xf]
    %v93 = vld [vmem:[#allocation5] sm:$0xf]
    %v94 = vld [vmem:[#allocation5 + $0x4] sm:$0xf]
    %v95 = vld [vmem:[#allocation5 + $0x8] sm:$0xf]
    %v96 = vld [vmem:[#allocation5 + $0xc] sm:$0xf]
    %v97 = vld [vmem:[#allocation5 + $0x10] sm:$0xf]
    %v98 = vld [vmem:[#allocation5 + $0x14] sm:$0xf]
    %v99 = vld [vmem:[#allocation5 + $0x18] sm:$0xf]
    %v100 = vld [vmem:[#allocation5 + $0x1c] sm:$0xf]
    %v101 = vld [vmem:[#allocation5 + $0x20] sm:$0xf]
    %v102 = vld [vmem:[#allocation5 + $0x24] sm:$0xf]
    %v103 = vld [vmem:[#allocation5 + $0x28] sm:$0xf]
    %v104 = vld [vmem:[#allocation5 + $0x2c] sm:$0xf]
    %v105 = vld [vmem:[#allocation5 + $0x30] sm:$0xf]
    %v106 = vld [vmem:[#allocation5 + $0x34] sm:$0xf]
    %v107 = vld [vmem:[#allocation5 + $0x38] sm:$0xf]
    %v108 = vld [vmem:[#allocation5 + $0x3c] sm:$0xf]
    %v109 = vlaneseq
    %v110 = vshrl.u32 %v109, 7
    %v111 = vsub.s32 0, %v110
    %v112 = vrot.slane %v91, %v111
    %v129 = vunpack.c.l.b16 %v93
    %v130 = vunpack.c.l.b16 %v94
    %v131 = vunpack.c.l.b16 %v95
    %v132 = vunpack.c.l.b16 %v96
    %v133 = vunpack.c.l.b16 %v97
    %v134 = vunpack.c.l.b16 %v98
    %v135 = vunpack.c.l.b16 %v99
    %v136 = vunpack.c.l.b16 %v100
    %v137 = vunpack.c.l.b16 %v101
    %v138 = vunpack.c.l.b16 %v102
    %v139 = vunpack.c.l.b16 %v103
    %v140 = vunpack.c.l.b16 %v104
    %v141 = vunpack.c.l.b16 %v105
    %v142 = vunpack.c.l.b16 %v106
    %v143 = vunpack.c.l.b16 %v107
    %v144 = vunpack.c.l.b16 %v108
    %v145 = vpack.c.b16 %v130, %v129
    %v146 = vpack.c.b16 %v132, %v131
    %v147 = vpack.c.b16 %v134, %v133
    %v148 = vpack.c.b16 %v136, %v135
    %v149 = vpack.c.b16 %v138, %v137
    %v150 = vpack.c.b16 %v140, %v139
    %v151 = vpack.c.b16 %v142, %v141
    %v152 = vpack.c.b16 %v144, %v143
    %161 = vmatprep.subr.bf16.mxu0 0
    %162 = vmatpush1.bf16.msra.mxu0 %v145
    %163 = vmatprep.subr.bf16.mxu0 0
    %164 = vmatpush1.bf16.msra.mxu0 %v146
    %165 = vmatprep.subr.bf16.mxu0 0
    %166 = vmatpush1.bf16.msra.mxu0 %v147
    %167 = vmatprep.subr.bf16.mxu0 0
    %168 = vmatpush1.bf16.msra.mxu0 %v148
    %169 = vmatprep.subr.bf16.mxu0 0
    %170 = vmatpush1.bf16.msra.mxu0 %v149
    %171 = vmatprep.subr.bf16.mxu0 0
    %172 = vmatpush1.bf16.msra.mxu0 %v150
    %173 = vmatprep.subr.bf16.mxu0 0
    %174 = vmatpush1.bf16.msra.mxu0 %v151
    %175 = vmatprep.subr.bf16.mxu0 0
    %176 = vmatpush1.bf16.msra.mxu0 %v152
    %177 = vmatprep.subr.bf16.mxu0 0
    %178 = vmatpush1.bf16.msra.mxu0 0
    %179 = vmatprep.subr.bf16.mxu0 0
    %180 = vmatpush1.bf16.msra.mxu0 0
    %181 = vmatprep.subr.bf16.mxu0 0
    %182 = vmatpush1.bf16.msra.mxu0 0
    %183 = vmatprep.subr.bf16.mxu0 0
    %184 = vmatpush1.bf16.msra.mxu0 0
    %185 = vmatprep.subr.bf16.mxu0 0
    %186 = vmatpush1.bf16.msra.mxu0 0
    %187 = vmatprep.subr.bf16.mxu0 0
    %188 = vmatpush1.bf16.msra.mxu0 0
    %189 = vmatprep.subr.bf16.mxu0 0
    %190 = vmatpush1.bf16.msra.mxu0 0
    %191 = vmatprep.subr.bf16.mxu0 0
    %192 = vmatpush1.bf16.msra.mxu0 0
    %193 = vmatprep.mubr.bf16.mxu0 0
    %194 = vmatmul.mubr.bf16.gmra.mrb[0].mxu0 %v92
    %v195 = vpop.f32.mrb[0].mxu0
    %v196 = vadd.f32 %v112, %v195
    %v197 = vpop.f32.mrb[0].mxu0
    %v198 = vpop.f32.mrb[0].mxu0
    %v199 = vpop.f32.mrb[0].mxu0
    %200 = vdwg.mxu0
    %v201 = vmax.f32 %v196, 0.0
    %v202 = vpack.c.bf16 %v201, %v201
    %v203 = vld [vmem:[#allocation7] sm:$0xf]
    %v204 = vld [vmem:[#allocation7 + $0x4] sm:$0xf]
    %v205 = vld [vmem:[#allocation7 + $0x8] sm:$0xf]
    %v206 = vld [vmem:[#allocation7 + $0xc] sm:$0xf]
    %v207 = vld [vmem:[#allocation7 + $0x10] sm:$0xf]
    %v208 = vld [vmem:[#allocation7 + $0x14] sm:$0xf]
    %v209 = vld [vmem:[#allocation7 + $0x18] sm:$0xf]
    %v210 = vld [vmem:[#allocation7 + $0x1c] sm:$0xf]
    %v211 = vld [vmem:[#allocation7 + $0x20] sm:$0xf]
    %v212 = vld [vmem:[#allocation7 + $0x24] sm:$0xf]
    %v213 = vld [vmem:[#allocation7 + $0x28] sm:$0xf]
    %v214 = vld [vmem:[#allocation7 + $0x2c] sm:$0xf]
    %v215 = vld [vmem:[#allocation7 + $0x30] sm:$0xf]
    %v216 = vld [vmem:[#allocation7 + $0x34] sm:$0xf]
    %v217 = vld [vmem:[#allocation7 + $0x38] sm:$0xf]
    %v218 = vld [vmem:[#allocation7 + $0x3c] sm:$0xf]
    %v219 = vlaneseq
    %v220 = vshrl.u32 %v219, 7
    %v221 = vsub.s32 1, %v220
    %v222 = vrot.slane %v91, %v221
    %v239 = vunpack.c.l.b16 %v203
    %v240 = vunpack.c.l.b16 %v204
    %v241 = vunpack.c.l.b16 %v205
    %v242 = vunpack.c.l.b16 %v206
    %v243 = vunpack.c.l.b16 %v207
    %v244 = vunpack.c.l.b16 %v208
    %v245 = vunpack.c.l.b16 %v209
    %v246 = vunpack.c.l.b16 %v210
    %v247 = vunpack.c.l.b16 %v211
    %v248 = vunpack.c.l.b16 %v212
    %v249 = vunpack.c.l.b16 %v213
    %v250 = vunpack.c.l.b16 %v214
    %v251 = vunpack.c.l.b16 %v215
    %v252 = vunpack.c.l.b16 %v216
    %v253 = vunpack.c.l.b16 %v217
    %v254 = vunpack.c.l.b16 %v218
    %v255 = vpack.c.b16 %v240, %v239
    %v256 = vpack.c.b16 %v242, %v241
    %v257 = vpack.c.b16 %v244, %v243
    %v258 = vpack.c.b16 %v246, %v245
    %v259 = vpack.c.b16 %v248, %v247
    %v260 = vpack.c.b16 %v250, %v249
    %v261 = vpack.c.b16 %v252, %v251
    %v262 = vpack.c.b16 %v254, %v253
    %271 = vmatprep.subr.bf16.mxu0 0
    %272 = vmatpush1.bf16.msra.mxu0 %v255
    %273 = vmatprep.subr.bf16.mxu0 0
    %274 = vmatpush1.bf16.msra.mxu0 %v256
    %275 = vmatprep.subr.bf16.mxu0 0
    %276 = vmatpush1.bf16.msra.mxu0 %v257
    %277 = vmatprep.subr.bf16.mxu0 0
    %278 = vmatpush1.bf16.msra.mxu0 %v258
    %279 = vmatprep.subr.bf16.mxu0 0
    %280 = vmatpush1.bf16.msra.mxu0 %v259
    %281 = vmatprep.subr.bf16.mxu0 0
    %282 = vmatpush1.bf16.msra.mxu0 %v260
    %283 = vmatprep.subr.bf16.mxu0 0
    %284 = vmatpush1.bf16.msra.mxu0 %v261
    %285 = vmatprep.subr.bf16.mxu0 0
    %286 = vmatpush1.bf16.msra.mxu0 %v262
    %287 = vmatprep.subr.bf16.mxu0 0
    %288 = vmatpush1.bf16.msra.mxu0 0
    %289 = vmatprep.subr.bf16.mxu0 0
    %290 = vmatpush1.bf16.msra.mxu0 0
    %291 = vmatprep.subr.bf16.mxu0 0
    %292 = vmatpush1.bf16.msra.mxu0 0
    %293 = vmatprep.subr.bf16.mxu0 0
    %294 = vmatpush1.bf16.msra.mxu0 0
    %295 = vmatprep.subr.bf16.mxu0 0
    %296 = vmatpush1.bf16.msra.mxu0 0
    %297 = vmatprep.subr.bf16.mxu0 0
    %298 = vmatpush1.bf16.msra.mxu0 0
    %299 = vmatprep.subr.bf16.mxu0 0
    %300 = vmatpush1.bf16.msra.mxu0 0
    %301 = vmatprep.subr.bf16.mxu0 0
    %302 = vmatpush1.bf16.msra.mxu0 0
    %303 = vmatprep.mubr.bf16.mxu0 0
    %304 = vmatmul.mubr.bf16.gmra.mrb[0].mxu0 %v202
    %v305 = vpop.f32.mrb[0].mxu0
    %v306 = vadd.f32 %v222, %v305
    %v307 = vpop.f32.mrb[0].mxu0
    %v308 = vpop.f32.mrb[0].mxu0
    %v309 = vpop.f32.mrb[0].mxu0
    %310 = vdwg.mxu0
    %v311 = vmax.f32 %v306, 0.0
    %v312 = vpack.c.bf16 %v311, %v311
    %v313 = vld [vmem:[#allocation8] sm:$0xf]
    %v314 = vld [vmem:[#allocation8 + $0x4] sm:$0xf]
    %v315 = vld [vmem:[#allocation8 + $0x8] sm:$0xf]
    %v316 = vld [vmem:[#allocation8 + $0xc] sm:$0xf]
    %v317 = vld [vmem:[#allocation8 + $0x10] sm:$0xf]
    %v318 = vld [vmem:[#allocation8 + $0x14] sm:$0xf]
    %v319 = vld [vmem:[#allocation8 + $0x18] sm:$0xf]
    %v320 = vld [vmem:[#allocation8 + $0x1c] sm:$0xf]
    %v321 = vld [vmem:[#allocation8 + $0x20] sm:$0xf]
    %v322 = vld [vmem:[#allocation8 + $0x24] sm:$0xf]
    %v323 = vld [vmem:[#allocation8 + $0x28] sm:$0xf]
    %v324 = vld [vmem:[#allocation8 + $0x2c] sm:$0xf]
    %v325 = vld [vmem:[#allocation8 + $0x30] sm:$0xf]
    %v326 = vld [vmem:[#allocation8 + $0x34] sm:$0xf]
    %v327 = vld [vmem:[#allocation8 + $0x38] sm:$0xf]
    %v328 = vld [vmem:[#allocation8 + $0x3c] sm:$0xf]
    %v329 = vlaneseq
    %v330 = vshrl.u32 %v329, 7
    %v331 = vsub.s32 2, %v330
    %v332 = vrot.slane %v91, %v331
    %v349 = vunpack.c.l.b16 %v313
    %v350 = vunpack.c.l.b16 %v314
    %v351 = vunpack.c.l.b16 %v315
    %v352 = vunpack.c.l.b16 %v316
    %v353 = vunpack.c.l.b16 %v317
    %v354 = vunpack.c.l.b16 %v318
    %v355 = vunpack.c.l.b16 %v319
    %v356 = vunpack.c.l.b16 %v320
    %v357 = vunpack.c.l.b16 %v321
    %v358 = vunpack.c.l.b16 %v322
    %v359 = vunpack.c.l.b16 %v323
    %v360 = vunpack.c.l.b16 %v324
    %v361 = vunpack.c.l.b16 %v325
    %v362 = vunpack.c.l.b16 %v326
    %v363 = vunpack.c.l.b16 %v327
    %v364 = vunpack.c.l.b16 %v328
    %v365 = vpack.c.b16 %v350, %v349
    %v366 = vpack.c.b16 %v352, %v351
    %v367 = vpack.c.b16 %v354, %v353
    %v368 = vpack.c.b16 %v356, %v355
    %v369 = vpack.c.b16 %v358, %v357
    %v370 = vpack.c.b16 %v360, %v359
    %v371 = vpack.c.b16 %v362, %v361
    %v372 = vpack.c.b16 %v364, %v363
    %381 = vmatprep.subr.bf16.mxu0 0
    %382 = vmatpush1.bf16.msra.mxu0 %v365
    %383 = vmatprep.subr.bf16.mxu0 0
    %384 = vmatpush1.bf16.msra.mxu0 %v366
    %385 = vmatprep.subr.bf16.mxu0 0
    %386 = vmatpush1.bf16.msra.mxu0 %v367
    %387 = vmatprep.subr.bf16.mxu0 0
    %388 = vmatpush1.bf16.msra.mxu0 %v368
    %389 = vmatprep.subr.bf16.mxu0 0
    %390 = vmatpush1.bf16.msra.mxu0 %v369
    %391 = vmatprep.subr.bf16.mxu0 0
    %392 = vmatpush1.bf16.msra.mxu0 %v370
    %393 = vmatprep.subr.bf16.mxu0 0
    %394 = vmatpush1.bf16.msra.mxu0 %v371
    %395 = vmatprep.subr.bf16.mxu0 0
    %396 = vmatpush1.bf16.msra.mxu0 %v372
    %397 = vmatprep.subr.bf16.mxu0 0
    %398 = vmatpush1.bf16.msra.mxu0 0
    %399 = vmatprep.subr.bf16.mxu0 0
    %400 = vmatpush1.bf16.msra.mxu0 0
    %401 = vmatprep.subr.bf16.mxu0 0
    %402 = vmatpush1.bf16.msra.mxu0 0
    %403 = vmatprep.subr.bf16.mxu0 0
    %404 = vmatpush1.bf16.msra.mxu0 0
    %405 = vmatprep.subr.bf16.mxu0 0
    %406 = vmatpush1.bf16.msra.mxu0 0
    %407 = vmatprep.subr.bf16.mxu0 0
    %408 = vmatpush1.bf16.msra.mxu0 0
    %409 = vmatprep.subr.bf16.mxu0 0
    %410 = vmatpush1.bf16.msra.mxu0 0
    %411 = vmatprep.subr.bf16.mxu0 0
    %412 = vmatpush1.bf16.msra.mxu0 0
    %413 = vmatprep.mubr.bf16.mxu0 0
    %414 = vmatmul.mubr.bf16.gmra.mrb[0].mxu0 %v312
    %v415 = vpop.f32.mrb[0].mxu0
    %v416 = vadd.f32 %v332, %v415
    %v417 = vpop.f32.mrb[0].mxu0
    %v418 = vpop.f32.mrb[0].mxu0
    %v419 = vpop.f32.mrb[0].mxu0
    %420 = vdwg.mxu0
    %v421 = vmax.f32 %v416, 0.0
    %v422 = vpack.c.bf16 %v421, %v421
    %v423 = vld [vmem:[#allocation10] sm:$0xf]
    %v424 = vld [vmem:[#allocation10 + $0x4] sm:$0xf]
    %v425 = vld [vmem:[#allocation10 + $0x8] sm:$0xf]
    %v426 = vld [vmem:[#allocation10 + $0xc] sm:$0xf]
    %v427 = vld [vmem:[#allocation10 + $0x10] sm:$0xf]
    %v428 = vld [vmem:[#allocation10 + $0x14] sm:$0xf]
    %v429 = vld [vmem:[#allocation10 + $0x18] sm:$0xf]
    %v430 = vld [vmem:[#allocation10 + $0x1c] sm:$0xf]
    %v431 = vld [vmem:[#allocation10 + $0x20] sm:$0xf]
    %v432 = vld [vmem:[#allocation10 + $0x24] sm:$0xf]
    %v433 = vld [vmem:[#allocation10 + $0x28] sm:$0xf]
    %v434 = vld [vmem:[#allocation10 + $0x2c] sm:$0xf]
    %v435 = vld [vmem:[#allocation10 + $0x30] sm:$0xf]
    %v436 = vld [vmem:[#allocation10 + $0x34] sm:$0xf]
    %v437 = vld [vmem:[#allocation10 + $0x38] sm:$0xf]
    %v438 = vld [vmem:[#allocation10 + $0x3c] sm:$0xf]
    %v439 = vlaneseq
    %v440 = vshrl.u32 %v439, 7
    %v441 = vsub.s32 3, %v440
    %v442 = vrot.slane %v91, %v441
    %v459 = vunpack.c.l.b16 %v423
    %v460 = vunpack.c.l.b16 %v424
    %v461 = vunpack.c.l.b16 %v425
    %v462 = vunpack.c.l.b16 %v426
    %v463 = vunpack.c.l.b16 %v427
    %v464 = vunpack.c.l.b16 %v428
    %v465 = vunpack.c.l.b16 %v429
    %v466 = vunpack.c.l.b16 %v430
    %v467 = vunpack.c.l.b16 %v431
    %v468 = vunpack.c.l.b16 %v432
    %v469 = vunpack.c.l.b16 %v433
    %v470 = vunpack.c.l.b16 %v434
    %v471 = vunpack.c.l.b16 %v435
    %v472 = vunpack.c.l.b16 %v436
    %v473 = vunpack.c.l.b16 %v437
    %v474 = vunpack.c.l.b16 %v438
    %v475 = vpack.c.b16 %v460, %v459
    %v476 = vpack.c.b16 %v462, %v461
    %v477 = vpack.c.b16 %v464, %v463
    %v478 = vpack.c.b16 %v466, %v465
    %v479 = vpack.c.b16 %v468, %v467
    %v480 = vpack.c.b16 %v470, %v469
    %v481 = vpack.c.b16 %v472, %v471
    %v482 = vpack.c.b16 %v474, %v473
    %491 = vmatprep.subr.bf16.mxu0 0
    %492 = vmatpush1.bf16.msra.mxu0 %v475
    %493 = vmatprep.subr.bf16.mxu0 0
    %494 = vmatpush1.bf16.msra.mxu0 %v476
    %495 = vmatprep.subr.bf16.mxu0 0
    %496 = vmatpush1.bf16.msra.mxu0 %v477
    %497 = vmatprep.subr.bf16.mxu0 0
    %498 = vmatpush1.bf16.msra.mxu0 %v478
    %499 = vmatprep.subr.bf16.mxu0 0
    %500 = vmatpush1.bf16.msra.mxu0 %v479
    %501 = vmatprep.subr.bf16.mxu0 0
    %502 = vmatpush1.bf16.msra.mxu0 %v480
    %503 = vmatprep.subr.bf16.mxu0 0
    %504 = vmatpush1.bf16.msra.mxu0 %v481
    %505 = vmatprep.subr.bf16.mxu0 0
    %506 = vmatpush1.bf16.msra.mxu0 %v482
    %507 = vmatprep.subr.bf16.mxu0 0
    %508 = vmatpush1.bf16.msra.mxu0 0
    %509 = vmatprep.subr.bf16.mxu0 0
    %510 = vmatpush1.bf16.msra.mxu0 0
    %511 = vmatprep.subr.bf16.mxu0 0
    %512 = vmatpush1.bf16.msra.mxu0 0
    %513 = vmatprep.subr.bf16.mxu0 0
    %514 = vmatpush1.bf16.msra.mxu0 0
    %515 = vmatprep.subr.bf16.mxu0 0
    %516 = vmatpush1.bf16.msra.mxu0 0
    %517 = vmatprep.subr.bf16.mxu0 0
    %518 = vmatpush1.bf16.msra.mxu0 0
    %519 = vmatprep.subr.bf16.mxu0 0
    %520 = vmatpush1.bf16.msra.mxu0 0
    %521 = vmatprep.subr.bf16.mxu0 0
    %522 = vmatpush1.bf16.msra.mxu0 0
    %523 = vmatprep.mubr.bf16.mxu0 0
    %524 = vmatmul.mubr.bf16.gmra.mrb[0].mxu0 %v422
    %v525 = vpop.f32.mrb[0].mxu0
    %v526 = vadd.f32 %v442, %v525
    %v527 = vpop.f32.mrb[0].mxu0
    %v528 = vpop.f32.mrb[0].mxu0
    %v529 = vpop.f32.mrb[0].mxu0
    %530 = vdwg.mxu0
    %531 = vst [vmem:[#allocation11] sm:$0xff] %v526
    // Predicated region
    $region46: #{tpu_custom_call.1} parent=1 // pred_check
      _
    $region47: #{tpu_custom_call.1} parent=1 // pred_check_branch
      %533 = sbr.rel (0) target = $region49
    $region48: #{tpu_custom_call.1} parent=1 // pred_region
      %s535 = ssub.s32 128, 128
      %536 = vsyncadd [#allocation4], %s535
      %s538 = sshll.u32 [#allocation11], 4
      %s539 = int_to_ptr.vmem [resolvable:$true] %s538
      %541 = dma.vmem_to_hbm [thread:$0]  %s539, 128, %s6, [#allocation4]
    $region49: #{tpu_custom_call.1} parent=1 // pred_fallthru
      _
    // Predicated region
    $region50: #{tpu_custom_call.1} parent=1 // pred_check
      _
    $region51: #{tpu_custom_call.1} parent=1 // pred_check_branch
      %543 = sbr.rel (0) target = $region53
    $region52: #{tpu_custom_call.1} parent=1 // pred_region
      %544 = dma.done [#allocation4], 128
    $region53: #{tpu_custom_call.1} parent=1 // pred_fallthru
      _
    %545 = vsyncpa [#allocation3], 1
    %546 = vsyncpa [#allocation6], 1
    %547 = vsyncpa [#allocation9], 1
    %548 = vsyncpa [#allocation4], 1

</llo_original>
